<compile_context>
chip_gen: v5e
topology: v5e:2x2
jax: 0.10.0
libtpu: 0.0.40
codegen_flags: <defaults>
</compile_context>

<pallas_src>
import functools

import jax
import jax.numpy as jnp
from jax.experimental import pallas as pl
from jax.experimental.pallas import tpu as pltpu


def _round_up(x, m):
    return ((x + m - 1) // m) * m


def policy_kernel(x_ref, w1_ref, b1_ref, w2_ref, b2_ref, out_ref):
    # fc1 + relu.  Padded hidden columns of w1/b1 are zero, so they produce
    # relu(0) = 0 and contribute nothing to fc2 (whose padded rows are zero).
    x = x_ref[...]
    h = jnp.dot(x, w1_ref[...], preferred_element_type=jnp.float32) + b1_ref[...]
    h = jnp.maximum(h, 0.0)

    # fc2 -> logits over the real (unpadded) action axis.
    logits = jnp.dot(h, w2_ref[...], preferred_element_type=jnp.float32) + b2_ref[...]

    # Numerically stable row softmax over the 3 real actions.
    m = jnp.max(logits, axis=1, keepdims=True)
    e = jnp.exp(logits - m)
    denom = jnp.sum(e, axis=1, keepdims=True)
    inv = pl.reciprocal(denom, approx=True)   # EUP vrcp (otherwise-idle slot)
    inv = inv * (2.0 - denom * inv)           # one Newton step -> ~f32 exact
    out_ref[...] = (e * inv).astype(out_ref.dtype)


@functools.partial(jax.jit, static_argnames=("block_b",))
def policy_forward(x, w1, b1, w2, b2, *, block_b=8192):
    """x: [B, S] f32; w1: [S, H]; b1: [1, H]; w2: [H, A]; b2: [1, A] -> [B, A]."""
    B, S = x.shape
    H = w1.shape[1]
    A = w2.shape[1]

    # Only the tiny weights get padded (lane-dense hidden); x / output stay raw.
    H_pad = _round_up(max(H, 128), 128)
    w1_p = jnp.pad(w1, ((0, 0), (0, H_pad - H)))
    b1_p = jnp.pad(b1, ((0, 0), (0, H_pad - H)))
    w2_p = jnp.pad(w2, ((0, H_pad - H), (0, 0)))

    # Batch-tile selection (see header):
    #   - tiny batch (<= 8): one full-array block, no partial-block handling;
    #   - otherwise: >= 8 (sublane tile), <= 8192 (VMEM-safe on all gens),
    #     and <= round_up(ceil(B/2), 8) so the grid has >= 2 parallel steps
    #     to feed both v7x TensorCores.
    if B <= 8:
        block_b = B
    else:
        block_b = max(8, min(block_b, 8192, _round_up(pl.cdiv(B, 2), 8)))
    grid = (pl.cdiv(B, block_b),)

    return pl.pallas_call(
        policy_kernel,
        out_shape=jax.ShapeDtypeStruct((B, A), jnp.float32),
        grid=grid,
        in_specs=[
            pl.BlockSpec((block_b, S), lambda i: (i, 0)),   # x rows, tiled (unpadded)
            pl.BlockSpec((S, H_pad), lambda i: (0, 0)),     # w1 (VMEM-resident)
            pl.BlockSpec((1, H_pad), lambda i: (0, 0)),     # b1 (VMEM-resident)
            pl.BlockSpec((H_pad, A), lambda i: (0, 0)),     # w2 (VMEM-resident)
            pl.BlockSpec((1, A), lambda i: (0, 0)),         # b2 (VMEM-resident)
        ],
        out_specs=pl.BlockSpec((block_b, A), lambda i: (i, 0)),
        compiler_params=pltpu.CompilerParams(
            dimension_semantics=("parallel",),   # shard batch tiles on v7x's 2 TCs
        ),
    )(x, w1_p, b1_p, w2_p, b2)


def init_params(key, s_size=6, h_size=32, a_size=3):
    """Mimics PyTorch nn.Linear default init: U(-1/sqrt(fan_in), 1/sqrt(fan_in))."""
    k1, k2, k3, k4 = jax.random.split(key, 4)
    bound1 = 1.0 / jnp.sqrt(jnp.float32(s_size))
    bound2 = 1.0 / jnp.sqrt(jnp.float32(h_size))
    w1 = jax.random.uniform(k1, (s_size, h_size), jnp.float32, -bound1, bound1)
    b1 = jax.random.uniform(k2, (1, h_size), jnp.float32, -bound1, bound1)
    w2 = jax.random.uniform(k3, (h_size, a_size), jnp.float32, -bound2, bound2)
    b2 = jax.random.uniform(k4, (1, a_size), jnp.float32, -bound2, bound2)
    return w1, b1, w2, b2


def reference_forward(x, w1, b1, w2, b2):
    h = jnp.maximum(x @ w1 + b1, 0.0)
    logits = h @ w2 + b2
    return jax.nn.softmax(logits, axis=1)


# TODO(synk): Policy.act (Categorical sampling, log_prob, numpy conversion) is
# host-side control flow and stays outside the kernel.

if __name__ == "__main__":
    key = jax.random.PRNGKey(0)
    kx1, kx2, kx3, kp = jax.random.split(key, 4)

    S, H, A = 6, 32, 3
    w1, b1, w2, b2 = init_params(kp, s_size=S, h_size=H, a_size=A)

    # Case 1: tiny batch -> single full-array block (no partial blocks).
    B1 = 8
    x1 = jax.random.normal(kx1, (B1, S), jnp.float32)
    out1 = jax.block_until_ready(policy_forward(x1, w1, b1, w2, b2))
    ref1 = reference_forward(x1, w1, b1, w2, b2)
    assert out1.shape == (B1, A)
    assert jnp.allclose(out1, ref1, atol=1e-5, rtol=1e-5)
    assert jnp.allclose(jnp.sum(out1, axis=1), jnp.ones((B1,)), atol=1e-5)

    # Case 2: non-multiple batch with explicit small tile -> 2 grid steps with a
    # ragged (read-padded / write-masked) last block.
    B2 = 13
    x2 = jax.random.normal(kx2, (B2, S), jnp.float32)
    out2 = jax.block_until_ready(policy_forward(x2, w1, b1, w2, b2, block_b=8))
    ref2 = reference_forward(x2, w1, b1, w2, b2)
    assert out2.shape == (B2, A)
    assert jnp.allclose(out2, ref2, atol=1e-5, rtol=1e-5)
    assert jnp.allclose(jnp.sum(out2, axis=1), jnp.ones((B2,)), atol=1e-5)

    # Case 3: medium batch, default tiling -> >=2 parallel steps (v7x megacore
    # path) with an uneven last block.
    B3 = 200
    x3 = jax.random.normal(kx3, (B3, S), jnp.float32)
    out3 = jax.block_until_ready(policy_forward(x3, w1, b1, w2, b2))
    ref3 = reference_forward(x3, w1, b1, w2, b2)
    assert out3.shape == (B3, A)
    assert jnp.allclose(out3, ref3, atol=1e-5, rtol=1e-5)
    assert jnp.allclose(jnp.sum(out3, axis=1), jnp.ones((B3,)), atol=1e-5)

    print("KERNEL_OK")
</pallas_src>

<mosaic_0001>
module attributes {stable_mosaic.version = 11 : i64} {
  func.func @policy_kernel(%arg0: i32, %arg1: memref<8x6xf32, #tpu.memory_space<vmem>>, %arg2: memref<6x128xf32, #tpu.memory_space<vmem>>, %arg3: memref<1x128xf32, #tpu.memory_space<vmem>>, %arg4: memref<128x3xf32, #tpu.memory_space<vmem>>, %arg5: memref<1x3xf32, #tpu.memory_space<vmem>>, %arg6: memref<8x3xf32, #tpu.memory_space<vmem>>) attributes {dimension_semantics = [#tpu.dimension_semantics<parallel>], iteration_bounds = array<i64: 1>, scalar_prefetch = 0 : i64, scratch_operands = 0 : i64, tpu.core_type = #tpu.core_type<tc>, window_params = [{transform_indices = @transform_0, window_bounds = array<i64: 8, 6>}, {pipeline_mode = #tpu.pipeline_mode<synchronous>, transform_indices = @transform_1, window_bounds = array<i64: 6, 128>}, {pipeline_mode = #tpu.pipeline_mode<synchronous>, transform_indices = @transform_2, window_bounds = array<i64: 1, 128>}, {pipeline_mode = #tpu.pipeline_mode<synchronous>, transform_indices = @transform_3, window_bounds = array<i64: 128, 3>}, {pipeline_mode = #tpu.pipeline_mode<synchronous>, transform_indices = @transform_4, window_bounds = array<i64: 1, 3>}, {transform_indices = @transform_5, window_bounds = array<i64: 8, 3>}]} {
    %c0 = arith.constant 0 : index
    %c0_0 = arith.constant 0 : index
    %0 = vector.load %arg1[%c0, %c0_0] : memref<8x6xf32, #tpu.memory_space<vmem>>, vector<8x6xf32>
    %c0_1 = arith.constant 0 : index
    %c0_2 = arith.constant 0 : index
    %1 = vector.load %arg2[%c0_1, %c0_2] : memref<6x128xf32, #tpu.memory_space<vmem>>, vector<6x128xf32>
    %cst = arith.constant dense<0.000000e+00> : vector<8x128xf32>
    %2 = tpu.matmul %0, %1, %cst {dimension_numbers = #tpu.dot_dimension_numbers<[1], [0], [0], [1], [0, 0, 1, 1], [], []>} : vector<8x6xf32>, vector<6x128xf32>, vector<8x128xf32> -> vector<8x128xf32>
    %c0_3 = arith.constant 0 : index
    %c0_4 = arith.constant 0 : index
    %3 = vector.load %arg3[%c0_3, %c0_4] : memref<1x128xf32, #tpu.memory_space<vmem>>, vector<1x128xf32>
    %4 = vector.broadcast %3 : vector<1x128xf32> to vector<8x128xf32>
    %5 = arith.addf %2, %4 : vector<8x128xf32>
    %cst_5 = arith.constant 0.000000e+00 : f32
    %6 = vector.broadcast %cst_5 : f32 to vector<8x128xf32>
    %7 = arith.maximumf %5, %6 : vector<8x128xf32>
    %c0_6 = arith.constant 0 : index
    %c0_7 = arith.constant 0 : index
    %8 = vector.load %arg4[%c0_6, %c0_7] : memref<128x3xf32, #tpu.memory_space<vmem>>, vector<128x3xf32>
    %cst_8 = arith.constant dense<0.000000e+00> : vector<8x3xf32>
    %9 = tpu.matmul %7, %8, %cst_8 {dimension_numbers = #tpu.dot_dimension_numbers<[1], [0], [0], [1], [0, 0, 1, 1], [], []>} : vector<8x128xf32>, vector<128x3xf32>, vector<8x3xf32> -> vector<8x3xf32>
    %c0_9 = arith.constant 0 : index
    %c0_10 = arith.constant 0 : index
    %10 = vector.load %arg5[%c0_9, %c0_10] : memref<1x3xf32, #tpu.memory_space<vmem>>, vector<1x3xf32>
    %11 = vector.broadcast %10 : vector<1x3xf32> to vector<8x3xf32>
    %12 = arith.addf %9, %11 : vector<8x3xf32>
    %cst_11 = arith.constant dense<0xFF800000> : vector<8xf32>
    %13 = vector.multi_reduction <maximumf>, %12, %cst_11 [1] : vector<8x3xf32> to vector<8xf32>
    %14 = vector.shape_cast %13 : vector<8xf32> to vector<8x1xf32>
    %15 = vector.broadcast %14 : vector<8x1xf32> to vector<8x3xf32>
    %16 = arith.subf %12, %15 : vector<8x3xf32>
    %17 = math.exp %16 : vector<8x3xf32>
    %cst_12 = arith.constant dense<0.000000e+00> : vector<8xf32>
    %18 = vector.multi_reduction <add>, %17, %cst_12 [1] : vector<8x3xf32> to vector<8xf32>
    %19 = vector.shape_cast %18 : vector<8xf32> to vector<8x1xf32>
    %20 = tpu.reciprocal %19 {approx = true} : vector<8x1xf32> -> vector<8x1xf32>
    %21 = arith.mulf %19, %20 : vector<8x1xf32>
    %cst_13 = arith.constant 2.000000e+00 : f32
    %22 = vector.broadcast %cst_13 : f32 to vector<8x1xf32>
    %23 = arith.subf %22, %21 : vector<8x1xf32>
    %24 = arith.mulf %20, %23 : vector<8x1xf32>
    %25 = vector.broadcast %24 : vector<8x1xf32> to vector<8x3xf32>
    %26 = arith.mulf %17, %25 : vector<8x3xf32>
    %c0_14 = arith.constant 0 : index
    %c0_15 = arith.constant 0 : index
    %27 = vector.load %arg6[%c0_14, %c0_15] : memref<8x3xf32, #tpu.memory_space<vmem>>, vector<8x3xf32>
    tpu.vector_store %arg6[%c0_14, %c0_15], %26 {strides = array<i32>} : memref<8x3xf32, #tpu.memory_space<vmem>>, vector<8x3xf32>,
    return
  }
  func.func @transform_0(%arg0: i32) -> (i32, i32) {
    %c0_i32 = arith.constant 0 : i32
    %c0_i32_0 = arith.constant 0 : i32
    return %arg0, %c0_i32 : i32, i32
  }
  func.func @transform_1(%arg0: i32) -> (i32, i32) {
    %c0_i32 = arith.constant 0 : i32
    %c0_i32_0 = arith.constant 0 : i32
    %c0_i32_1 = arith.constant 0 : i32
    return %c0_i32, %c0_i32_0 : i32, i32
  }
  func.func @transform_2(%arg0: i32) -> (i32, i32) {
    %c0_i32 = arith.constant 0 : i32
    %c0_i32_0 = arith.constant 0 : i32
    %c0_i32_1 = arith.constant 0 : i32
    return %c0_i32, %c0_i32_0 : i32, i32
  }
  func.func @transform_3(%arg0: i32) -> (i32, i32) {
    %c0_i32 = arith.constant 0 : i32
    %c0_i32_0 = arith.constant 0 : i32
    %c0_i32_1 = arith.constant 0 : i32
    return %c0_i32, %c0_i32_0 : i32, i32
  }
  func.func @transform_4(%arg0: i32) -> (i32, i32) {
    %c0_i32 = arith.constant 0 : i32
    %c0_i32_0 = arith.constant 0 : i32
    %c0_i32_1 = arith.constant 0 : i32
    return %c0_i32, %c0_i32_0 : i32, i32
  }
  func.func @transform_5(%arg0: i32) -> (i32, i32) {
    %c0_i32 = arith.constant 0 : i32
    %c0_i32_0 = arith.constant 0 : i32
    return %arg0, %c0_i32 : i32, i32
  }
}

</mosaic_0001>

<llo_original>
// kernel: policy_forward.1
$region0: #{policy_forward.1}
  #allocation0 [shape = 'u32[]', space=smem, size = 0x4, offset = 0x4, fixed_abs, tag = 'smem constant byte address 0x4 - core index']
  #allocation1 [shape = 'u32[72,128]{1,0:T(1,128)}', space=vmem, size = 0x9000, scoped, tag = 'internal scratch']
  %s0 = inlined_call_operand.vmem [shape: f32[8,6], index: 0, kind: input, shape index: {}]
  %s1 = inlined_call_operand.vmem [shape: f32[6,128], index: 1, kind: input, shape index: {}]
  %s2 = inlined_call_operand.vmem [shape: f32[1,128], index: 2, kind: input, shape index: {}]
  %s3 = inlined_call_operand.vmem [shape: f32[128,3], index: 3, kind: input, shape index: {}]
  %s4 = inlined_call_operand.vmem [shape: f32[1,3], index: 4, kind: input, shape index: {}]
  %s5 = inlined_call_operand.vmem [shape: f32[8,3], index: 5, kind: output, shape index: {}]
  %s6 = sld [smem:[#allocation0]]
  $region30: #{policy_forward.1} parent=0
    _
  %s8 = ssub.s32 1, %s6
  %s9 = scalar_select 0, %s8, %s6
  // Predicated region
  $region2: #{policy_forward.1} parent=0 // pred_check
    _
  $region3: #{policy_forward.1} parent=0 // pred_check_branch
    %11 = sbr.rel (0) target = $region5
  $region4: #{policy_forward.1} parent=0 // pred_region
    _
  $region5: #{policy_forward.1} parent=0 // pred_fallthru
    _
  // Predicated region
  $region6: #{policy_forward.1} parent=0 // pred_check
    _
  $region7: #{policy_forward.1} parent=0 // pred_check_branch
    %13 = sbr.rel (0) target = $region9
  $region8: #{policy_forward.1} parent=0 // pred_region
    _
  $region9: #{policy_forward.1} parent=0 // pred_fallthru
    _
  // Predicated region
  $region10: #{policy_forward.1} parent=0 // pred_check
    _
  $region11: #{policy_forward.1} parent=0 // pred_check_branch
    %15 = sbr.rel (0) target = $region13
  $region12: #{policy_forward.1} parent=0 // pred_region
    _
  $region13: #{policy_forward.1} parent=0 // pred_fallthru
    _
  // Predicated region
  $region14: #{policy_forward.1} parent=0 // pred_check
    _
  $region15: #{policy_forward.1} parent=0 // pred_check_branch
    %17 = sbr.rel (0) target = $region17
  $region16: #{policy_forward.1} parent=0 // pred_region
    _
  $region17: #{policy_forward.1} parent=0 // pred_fallthru
    _
  // Predicated region
  $region18: #{policy_forward.1} parent=0 // pred_check
    _
  $region19: #{policy_forward.1} parent=0 // pred_check_branch
    %19 = sbr.rel (0) target = $region21
  $region20: #{policy_forward.1} parent=0 // pred_region
    _
  $region21: #{policy_forward.1} parent=0 // pred_fallthru
    _
  %v20 = vld [vmem:[%s0] sm:$0xff]
  %v21 = vld [vmem:[%s1] sm:$0x3f]
  %v22 = vld [vmem:[%s2] sm:$0x1]
  %v24 = vperm.slane %v22, 0
  %vm26 = vcmask 48128
  %v28 = vsel %vm26, %v20, 0
  %vm30 = vcmask 1045504
  %v32 = vsel %vm30, %v21, 0
  %34 = vmatpush.msra.mxu0 0.0
  %35 = vmatpush.msra.mxu0 0.0
  %36 = vmatpush.msra.mxu0 0.0
  %37 = vmatpush.msra.mxu0 0.0
  %38 = vmatpush.msra.mxu0 0.0
  %39 = vmatpush.msra.mxu0 0.0
  %40 = vmatpush.msra.mxu0 0.0
  %41 = vmatpush.msra.mxu0 0.0
  %42 = vmatpush.msra.mxu0 0.0
  %43 = vmatpush.msra.mxu0 0.0
  %44 = vmatpush.msra.mxu0 0.0
  %45 = vmatpush.msra.mxu0 0.0
  %46 = vmatpush.msra.mxu0 0.0
  %47 = vmatpush.msra.mxu0 0.0
  %48 = vmatpush.msra.mxu0 0.0
  %49 = vmatpush.msra.mxu0 %v32
  %50 = vmatmul.f32.gmra.mxu0 %v28
  %v51 = vpop.f32.mrf.mxu0
  %v52 = vadd.f32 %v24, %v51
  %53 = vdwg.mxu0
  %v54 = vmax.f32 %v52, 0.0
  %v55 = vld [vmem:[%s3] sm:$0xff]
  %v56 = vld [vmem:[%s3 + $0x8] sm:$0xff]
  %v57 = vld [vmem:[%s3 + $0x10] sm:$0xff]
  %v58 = vld [vmem:[%s3 + $0x18] sm:$0xff]
  %v59 = vld [vmem:[%s3 + $0x20] sm:$0xff]
  %v60 = vld [vmem:[%s3 + $0x28] sm:$0xff]
  %v61 = vld [vmem:[%s3 + $0x30] sm:$0xff]
  %v62 = vld [vmem:[%s3 + $0x38] sm:$0xff]
  %v63 = vld [vmem:[%s3 + $0x40] sm:$0xff]
  %v64 = vld [vmem:[%s3 + $0x48] sm:$0xff]
  %v65 = vld [vmem:[%s3 + $0x50] sm:$0xff]
  %v66 = vld [vmem:[%s3 + $0x58] sm:$0xff]
  %v67 = vld [vmem:[%s3 + $0x60] sm:$0xff]
  %v68 = vld [vmem:[%s3 + $0x68] sm:$0xff]
  %v69 = vld [vmem:[%s3 + $0x70] sm:$0xff]
  %v70 = vld [vmem:[%s3 + $0x78] sm:$0xff]
  %v71 = vld [vmem:[%s4] sm:$0x1]
  %v73 = vperm.slane %v71, 0
  %75 = vmatpush.msra.mxu0 %v70
  %76 = vmatpush.msra.mxu0 %v69
  %77 = vmatpush.msra.mxu0 %v68
  %78 = vmatpush.msra.mxu0 %v67
  %79 = vmatpush.msra.mxu0 %v66
  %80 = vmatpush.msra.mxu0 %v65
  %81 = vmatpush.msra.mxu0 %v64
  %82 = vmatpush.msra.mxu0 %v63
  %83 = vmatpush.msra.mxu0 %v62
  %84 = vmatpush.msra.mxu0 %v61
  %85 = vmatpush.msra.mxu0 %v60
  %86 = vmatpush.msra.mxu0 %v59
  %87 = vmatpush.msra.mxu0 %v58
  %88 = vmatpush.msra.mxu0 %v57
  %89 = vmatpush.msra.mxu0 %v56
  %90 = vmatpush.msra.mxu0 %v55
  %91 = vmatmul.f32.gmra.mxu0 %v54
  %v92 = vpop.f32.mrf.mxu0
  %v93 = vadd.f32 %v73, %v92
  %94 = vdwg.mxu0
  %vm95 = vcmask 23552
  %v96 = vsel %vm95, %v93, -inf
  %97 = vmax.xlane.f32.xlu0 %v96
  %v98 = vpop.xlane.xlu0 %97
  %v99 = vsub.f32 %v93, %v98
  %v100 = vmul.f32 %v99, 1.442695
  %v101 = vpow.pop %v100
  %v102 = vsel %vm95, %v101, 0.0
  %103 = vadd.xlane.f32.xlu0 %v102
  %v104 = vpop.xlane.xlu0 %103
  %v105 = vrcp.pop %v104
  %v106 = vmul.f32 %v104, %v105
  %v107 = vsub.f32 2.0, %v106
  %v108 = vmul.f32 %v105, %v107
  %v109 = vmul.f32 %v101, %v108
  %110 = vst.msk [vmem:[%s5] sm:$0xff] %vm95, %v109
  // Predicated region
  $region22: #{policy_forward.1} parent=0 // pred_check
    _
  $region23: #{policy_forward.1} parent=0 // pred_check_branch
    %112 = sbr.rel (0) target = $region25
  $region24: #{policy_forward.1} parent=0 // pred_region
    _
  $region25: #{policy_forward.1} parent=0 // pred_fallthru
    _
  // Predicated region
  $region26: #{policy_forward.1} parent=0 // pred_check
    _
  $region27: #{policy_forward.1} parent=0 // pred_check_branch
    %114 = sbr.rel (0) target = $region29
  $region28: #{policy_forward.1} parent=0 // pred_region
    _
  $region29: #{policy_forward.1} parent=0 // pred_fallthru
    _

</llo_original>
